<compile_context>
chip_gen: v6e
topology: v6e:2x2x1
jax: 0.10.0
libtpu: 0.0.40
codegen_flags: <defaults>
</compile_context>

<pallas_src>
from functools import partial

import jax
import jax.numpy as jnp
from jax.experimental import pallas as pl
from jax.experimental.pallas import tpu as pltpu


HIDDEN = 20
LANES = 128
SUBLANES = 8
# 4096 rows x 128 lanes x 4 B = 2 MiB per buffer; double-buffered in+out
# footprint = 8 MiB, which fits every generation's scoped VMEM default
# (v5e 16 MiB / v6e 32 MiB / v7x 32 MiB); we still set vmem_limit_bytes
# explicitly for headroom/documentation.
MAX_TILE_ROWS = 4096
# Only split the grid (for v7x's two TensorCores) once a tile would carry
# at least ~1 MiB of rows; below that the fixed per-step overhead dominates.
SPLIT_THRESHOLD_ROWS = 2048
VMEM_LIMIT_BYTES = 32 * 1024 * 1024


def mlp_kernel(params_ref, x_ref, o_ref):
    # params_ref: (64,) f32 in SMEM = [w1(20) | b1(20) | w2(20) | b2(1) | pad(3)]
    # x_ref, o_ref: (TR, 128) f32 lane-dense tiles in VMEM.
    x = x_ref[...]
    b2 = params_ref[3 * HIDDEN]
    # 4 independent partial accumulators -> 4 parallel VALU dependency chains.
    acc = [jnp.zeros(x.shape, jnp.float32) for _ in range(4)]
    for j in range(HIDDEN):  # fully unrolled VPU loop; scalars come from SMEM
        w1j = params_ref[j]
        b1j = params_ref[HIDDEN + j]
        w2j = params_ref[2 * HIDDEN + j]
        h = jnp.maximum(x * w1j + b1j, 0.0)  # ReLU(hidden)
        acc[j % 4] = acc[j % 4] + h * w2j    # predict accumulation
    o_ref[...] = (acc[0] + acc[1]) + (acc[2] + acc[3]) + b2


def _round_up(v, m):
    return -(-v // m) * m


def _choose_tile_rows(rows):
    """Rows per grid step.

    - rows <  SPLIT_THRESHOLD_ROWS : one grid step (no per-step overhead).
    - rows >= SPLIT_THRESHOLD_ROWS : balanced 2-way split (v7x megacore),
      capped at MAX_TILE_ROWS rows per step for very large inputs.
    """
    rows = _round_up(max(rows, SUBLANES), SUBLANES)
    if rows < SPLIT_THRESHOLD_ROWS:
        return rows
    half = _round_up(-(-rows // 2), SUBLANES)
    return min(half, MAX_TILE_ROWS)


@jax.jit
def net_forward(x, w1, b1, w2, b2):
    """x: (N, 1) float32.  Returns (N, 1) float32 (same semantics as Net.forward)."""
    N = x.shape[0]

    # Pack all 61 parameters into one SMEM-resident scalar table (padded to 64).
    params = jnp.concatenate([
        w1.reshape(-1).astype(jnp.float32),
        b1.reshape(-1).astype(jnp.float32),
        w2.reshape(-1).astype(jnp.float32),
        b2.reshape(-1).astype(jnp.float32),
        jnp.zeros((3,), jnp.float32),
    ])

    # Lane-dense layout: N samples -> (rows_pad, 128) with zero padding
    # (fused inside this jit, not a separate eager HBM pass).
    rows = pl.cdiv(N, LANES)
    tr = _choose_tile_rows(rows)
    rows_pad = _round_up(max(rows, SUBLANES), tr)
    total = rows_pad * LANES
    x_flat = jnp.pad(x.reshape(-1).astype(jnp.float32), (0, total - N))
    x2d = x_flat.reshape(rows_pad, LANES)
    grid = (rows_pad // tr,)

    out2d = pl.pallas_call(
        mlp_kernel,
        out_shape=jax.ShapeDtypeStruct((rows_pad, LANES), jnp.float32),
        grid_spec=pltpu.PrefetchScalarGridSpec(
            num_scalar_prefetch=0,
            grid=grid,
            in_specs=[
                pl.BlockSpec(memory_space=pltpu.MemorySpace.SMEM),  # params (whole, SMEM)
                pl.BlockSpec((tr, LANES), lambda i: (i, 0)),        # x row tile (lane-dense)
            ],
            out_specs=pl.BlockSpec((tr, LANES), lambda i: (i, 0)),  # unmasked full-lane stores
        ),
        compiler_params=pltpu.CompilerParams(
            dimension_semantics=("parallel",),
            vmem_limit_bytes=VMEM_LIMIT_BYTES,
        ),
    )(params, x2d)

    # Slice stays inside the jit so it fuses with the kernel's output handling.
    return out2d.reshape(-1)[:N].reshape(N, 1)


def _reference(x, w1, b1, w2, b2):
    h = jnp.maximum(x @ w1 + b1, 0.0)
    return h @ w2 + b2


if __name__ == "__main__":
    key = jax.random.PRNGKey(0)
    k_w1, k_b1, k_w2, k_b2 = jax.random.split(key, 4)

    # Deterministic parameter init (mimics nn.Linear's uniform init scale).
    # PyTorch stores weight as (out, in); we store the transpose (in, out).
    w1 = jax.random.uniform(k_w1, (1, HIDDEN), jnp.float32, -1.0, 1.0)
    b1 = jax.random.uniform(k_b1, (1, HIDDEN), jnp.float32, -1.0, 1.0)
    bound2 = 1.0 / (HIDDEN ** 0.5)
    w2 = jax.random.uniform(k_w2, (HIDDEN, 1), jnp.float32, -bound2, bound2)
    b2 = jax.random.uniform(k_b2, (1, 1), jnp.float32, -bound2, bound2)

    # N=1000 matches the PyTorch script's linspace(-1, 1, 1000) column vector;
    # N=3000 additionally exercises padding with a single-step grid.
    for N in (1000, 3000):
        x = jnp.linspace(-1.0, 1.0, N, dtype=jnp.float32).reshape(N, 1)
        out = jax.block_until_ready(net_forward(x, w1, b1, w2, b2))
        ref = _reference(x, w1, b1, w2, b2)
        assert out.shape == (N, 1)
        assert jnp.allclose(out, ref, atol=1e-5, rtol=1e-5)

    print("KERNEL_OK")
</pallas_src>

<mosaic_0001>
module attributes {stable_mosaic.version = 11 : i64} {
  func.func @mlp_kernel(%arg0: i32, %arg1: memref<64xf32, #tpu.memory_space<smem>>, %arg2: memref<8x128xf32, #tpu.memory_space<vmem>>, %arg3: memref<8x128xf32, #tpu.memory_space<vmem>>) attributes {dimension_semantics = [#tpu.dimension_semantics<parallel>], iteration_bounds = array<i64: 1>, scalar_prefetch = 0 : i64, scratch_operands = 0 : i64, tpu.core_type = #tpu.core_type<tc>, window_params = [{transform_indices = @transform_0, window_bounds = array<i64: 64>}, {transform_indices = @transform_1, window_bounds = array<i64: 8, 128>}, {transform_indices = @transform_2, window_bounds = array<i64: 8, 128>}]} {
    %c0 = arith.constant 0 : index
    %c0_0 = arith.constant 0 : index
    %0 = vector.load %arg2[%c0, %c0_0] : memref<8x128xf32, #tpu.memory_space<vmem>>, vector<8x128xf32>
    %c60 = arith.constant 60 : index
    %1 = memref.load %arg1[%c60] : memref<64xf32, #tpu.memory_space<smem>>
    %cst = arith.constant 0.000000e+00 : f32
    %2 = vector.broadcast %cst : f32 to vector<8x128xf32>
    %cst_1 = arith.constant 0.000000e+00 : f32
    %3 = vector.broadcast %cst_1 : f32 to vector<8x128xf32>
    %cst_2 = arith.constant 0.000000e+00 : f32
    %4 = vector.broadcast %cst_2 : f32 to vector<8x128xf32>
    %cst_3 = arith.constant 0.000000e+00 : f32
    %5 = vector.broadcast %cst_3 : f32 to vector<8x128xf32>
    %c0_4 = arith.constant 0 : index
    %6 = memref.load %arg1[%c0_4] : memref<64xf32, #tpu.memory_space<smem>>
    %c20 = arith.constant 20 : index
    %7 = memref.load %arg1[%c20] : memref<64xf32, #tpu.memory_space<smem>>
    %c40 = arith.constant 40 : index
    %8 = memref.load %arg1[%c40] : memref<64xf32, #tpu.memory_space<smem>>
    %9 = vector.broadcast %6 : f32 to vector<8x128xf32>
    %10 = arith.mulf %0, %9 : vector<8x128xf32>
    %11 = vector.broadcast %7 : f32 to vector<8x128xf32>
    %12 = arith.addf %10, %11 : vector<8x128xf32>
    %cst_5 = arith.constant 0.000000e+00 : f32
    %13 = vector.broadcast %cst_5 : f32 to vector<8x128xf32>
    %14 = arith.maximumf %12, %13 : vector<8x128xf32>
    %15 = vector.broadcast %8 : f32 to vector<8x128xf32>
    %16 = arith.mulf %14, %15 : vector<8x128xf32>
    %17 = arith.addf %2, %16 : vector<8x128xf32>
    %c1 = arith.constant 1 : index
    %18 = memref.load %arg1[%c1] : memref<64xf32, #tpu.memory_space<smem>>
    %c21 = arith.constant 21 : index
    %19 = memref.load %arg1[%c21] : memref<64xf32, #tpu.memory_space<smem>>
    %c41 = arith.constant 41 : index
    %20 = memref.load %arg1[%c41] : memref<64xf32, #tpu.memory_space<smem>>
    %21 = vector.broadcast %18 : f32 to vector<8x128xf32>
    %22 = arith.mulf %0, %21 : vector<8x128xf32>
    %23 = vector.broadcast %19 : f32 to vector<8x128xf32>
    %24 = arith.addf %22, %23 : vector<8x128xf32>
    %cst_6 = arith.constant 0.000000e+00 : f32
    %25 = vector.broadcast %cst_6 : f32 to vector<8x128xf32>
    %26 = arith.maximumf %24, %25 : vector<8x128xf32>
    %27 = vector.broadcast %20 : f32 to vector<8x128xf32>
    %28 = arith.mulf %26, %27 : vector<8x128xf32>
    %29 = arith.addf %3, %28 : vector<8x128xf32>
    %c2 = arith.constant 2 : index
    %30 = memref.load %arg1[%c2] : memref<64xf32, #tpu.memory_space<smem>>
    %c22 = arith.constant 22 : index
    %31 = memref.load %arg1[%c22] : memref<64xf32, #tpu.memory_space<smem>>
    %c42 = arith.constant 42 : index
    %32 = memref.load %arg1[%c42] : memref<64xf32, #tpu.memory_space<smem>>
    %33 = vector.broadcast %30 : f32 to vector<8x128xf32>
    %34 = arith.mulf %0, %33 : vector<8x128xf32>
    %35 = vector.broadcast %31 : f32 to vector<8x128xf32>
    %36 = arith.addf %34, %35 : vector<8x128xf32>
    %cst_7 = arith.constant 0.000000e+00 : f32
    %37 = vector.broadcast %cst_7 : f32 to vector<8x128xf32>
    %38 = arith.maximumf %36, %37 : vector<8x128xf32>
    %39 = vector.broadcast %32 : f32 to vector<8x128xf32>
    %40 = arith.mulf %38, %39 : vector<8x128xf32>
    %41 = arith.addf %4, %40 : vector<8x128xf32>
    %c3 = arith.constant 3 : index
    %42 = memref.load %arg1[%c3] : memref<64xf32, #tpu.memory_space<smem>>
    %c23 = arith.constant 23 : index
    %43 = memref.load %arg1[%c23] : memref<64xf32, #tpu.memory_space<smem>>
    %c43 = arith.constant 43 : index
    %44 = memref.load %arg1[%c43] : memref<64xf32, #tpu.memory_space<smem>>
    %45 = vector.broadcast %42 : f32 to vector<8x128xf32>
    %46 = arith.mulf %0, %45 : vector<8x128xf32>
    %47 = vector.broadcast %43 : f32 to vector<8x128xf32>
    %48 = arith.addf %46, %47 : vector<8x128xf32>
    %cst_8 = arith.constant 0.000000e+00 : f32
    %49 = vector.broadcast %cst_8 : f32 to vector<8x128xf32>
    %50 = arith.maximumf %48, %49 : vector<8x128xf32>
    %51 = vector.broadcast %44 : f32 to vector<8x128xf32>
    %52 = arith.mulf %50, %51 : vector<8x128xf32>
    %53 = arith.addf %5, %52 : vector<8x128xf32>
    %c4 = arith.constant 4 : index
    %54 = memref.load %arg1[%c4] : memref<64xf32, #tpu.memory_space<smem>>
    %c24 = arith.constant 24 : index
    %55 = memref.load %arg1[%c24] : memref<64xf32, #tpu.memory_space<smem>>
    %c44 = arith.constant 44 : index
    %56 = memref.load %arg1[%c44] : memref<64xf32, #tpu.memory_space<smem>>
    %57 = vector.broadcast %54 : f32 to vector<8x128xf32>
    %58 = arith.mulf %0, %57 : vector<8x128xf32>
    %59 = vector.broadcast %55 : f32 to vector<8x128xf32>
    %60 = arith.addf %58, %59 : vector<8x128xf32>
    %cst_9 = arith.constant 0.000000e+00 : f32
    %61 = vector.broadcast %cst_9 : f32 to vector<8x128xf32>
    %62 = arith.maximumf %60, %61 : vector<8x128xf32>
    %63 = vector.broadcast %56 : f32 to vector<8x128xf32>
    %64 = arith.mulf %62, %63 : vector<8x128xf32>
    %65 = arith.addf %17, %64 : vector<8x128xf32>
    %c5 = arith.constant 5 : index
    %66 = memref.load %arg1[%c5] : memref<64xf32, #tpu.memory_space<smem>>
    %c25 = arith.constant 25 : index
    %67 = memref.load %arg1[%c25] : memref<64xf32, #tpu.memory_space<smem>>
    %c45 = arith.constant 45 : index
    %68 = memref.load %arg1[%c45] : memref<64xf32, #tpu.memory_space<smem>>
    %69 = vector.broadcast %66 : f32 to vector<8x128xf32>
    %70 = arith.mulf %0, %69 : vector<8x128xf32>
    %71 = vector.broadcast %67 : f32 to vector<8x128xf32>
    %72 = arith.addf %70, %71 : vector<8x128xf32>
    %cst_10 = arith.constant 0.000000e+00 : f32
    %73 = vector.broadcast %cst_10 : f32 to vector<8x128xf32>
    %74 = arith.maximumf %72, %73 : vector<8x128xf32>
    %75 = vector.broadcast %68 : f32 to vector<8x128xf32>
    %76 = arith.mulf %74, %75 : vector<8x128xf32>
    %77 = arith.addf %29, %76 : vector<8x128xf32>
    %c6 = arith.constant 6 : index
    %78 = memref.load %arg1[%c6] : memref<64xf32, #tpu.memory_space<smem>>
    %c26 = arith.constant 26 : index
    %79 = memref.load %arg1[%c26] : memref<64xf32, #tpu.memory_space<smem>>
    %c46 = arith.constant 46 : index
    %80 = memref.load %arg1[%c46] : memref<64xf32, #tpu.memory_space<smem>>
    %81 = vector.broadcast %78 : f32 to vector<8x128xf32>
    %82 = arith.mulf %0, %81 : vector<8x128xf32>
    %83 = vector.broadcast %79 : f32 to vector<8x128xf32>
    %84 = arith.addf %82, %83 : vector<8x128xf32>
    %cst_11 = arith.constant 0.000000e+00 : f32
    %85 = vector.broadcast %cst_11 : f32 to vector<8x128xf32>
    %86 = arith.maximumf %84, %85 : vector<8x128xf32>
    %87 = vector.broadcast %80 : f32 to vector<8x128xf32>
    %88 = arith.mulf %86, %87 : vector<8x128xf32>
    %89 = arith.addf %41, %88 : vector<8x128xf32>
    %c7 = arith.constant 7 : index
    %90 = memref.load %arg1[%c7] : memref<64xf32, #tpu.memory_space<smem>>
    %c27 = arith.constant 27 : index
    %91 = memref.load %arg1[%c27] : memref<64xf32, #tpu.memory_space<smem>>
    %c47 = arith.constant 47 : index
    %92 = memref.load %arg1[%c47] : memref<64xf32, #tpu.memory_space<smem>>
    %93 = vector.broadcast %90 : f32 to vector<8x128xf32>
    %94 = arith.mulf %0, %93 : vector<8x128xf32>
    %95 = vector.broadcast %91 : f32 to vector<8x128xf32>
    %96 = arith.addf %94, %95 : vector<8x128xf32>
    %cst_12 = arith.constant 0.000000e+00 : f32
    %97 = vector.broadcast %cst_12 : f32 to vector<8x128xf32>
    %98 = arith.maximumf %96, %97 : vector<8x128xf32>
    %99 = vector.broadcast %92 : f32 to vector<8x128xf32>
    %100 = arith.mulf %98, %99 : vector<8x128xf32>
    %101 = arith.addf %53, %100 : vector<8x128xf32>
    %c8 = arith.constant 8 : index
    %102 = memref.load %arg1[%c8] : memref<64xf32, #tpu.memory_space<smem>>
    %c28 = arith.constant 28 : index
    %103 = memref.load %arg1[%c28] : memref<64xf32, #tpu.memory_space<smem>>
    %c48 = arith.constant 48 : index
    %104 = memref.load %arg1[%c48] : memref<64xf32, #tpu.memory_space<smem>>
    %105 = vector.broadcast %102 : f32 to vector<8x128xf32>
    %106 = arith.mulf %0, %105 : vector<8x128xf32>
    %107 = vector.broadcast %103 : f32 to vector<8x128xf32>
    %108 = arith.addf %106, %107 : vector<8x128xf32>
    %cst_13 = arith.constant 0.000000e+00 : f32
    %109 = vector.broadcast %cst_13 : f32 to vector<8x128xf32>
    %110 = arith.maximumf %108, %109 : vector<8x128xf32>
    %111 = vector.broadcast %104 : f32 to vector<8x128xf32>
    %112 = arith.mulf %110, %111 : vector<8x128xf32>
    %113 = arith.addf %65, %112 : vector<8x128xf32>
    %c9 = arith.constant 9 : index
    %114 = memref.load %arg1[%c9] : memref<64xf32, #tpu.memory_space<smem>>
    %c29 = arith.constant 29 : index
    %115 = memref.load %arg1[%c29] : memref<64xf32, #tpu.memory_space<smem>>
    %c49 = arith.constant 49 : index
    %116 = memref.load %arg1[%c49] : memref<64xf32, #tpu.memory_space<smem>>
    %117 = vector.broadcast %114 : f32 to vector<8x128xf32>
    %118 = arith.mulf %0, %117 : vector<8x128xf32>
    %119 = vector.broadcast %115 : f32 to vector<8x128xf32>
    %120 = arith.addf %118, %119 : vector<8x128xf32>
    %cst_14 = arith.constant 0.000000e+00 : f32
    %121 = vector.broadcast %cst_14 : f32 to vector<8x128xf32>
    %122 = arith.maximumf %120, %121 : vector<8x128xf32>
    %123 = vector.broadcast %116 : f32 to vector<8x128xf32>
    %124 = arith.mulf %122, %123 : vector<8x128xf32>
    %125 = arith.addf %77, %124 : vector<8x128xf32>
    %c10 = arith.constant 10 : index
    %126 = memref.load %arg1[%c10] : memref<64xf32, #tpu.memory_space<smem>>
    %c30 = arith.constant 30 : index
    %127 = memref.load %arg1[%c30] : memref<64xf32, #tpu.memory_space<smem>>
    %c50 = arith.constant 50 : index
    %128 = memref.load %arg1[%c50] : memref<64xf32, #tpu.memory_space<smem>>
    %129 = vector.broadcast %126 : f32 to vector<8x128xf32>
    %130 = arith.mulf %0, %129 : vector<8x128xf32>
    %131 = vector.broadcast %127 : f32 to vector<8x128xf32>
    %132 = arith.addf %130, %131 : vector<8x128xf32>
    %cst_15 = arith.constant 0.000000e+00 : f32
    %133 = vector.broadcast %cst_15 : f32 to vector<8x128xf32>
    %134 = arith.maximumf %132, %133 : vector<8x128xf32>
    %135 = vector.broadcast %128 : f32 to vector<8x128xf32>
    %136 = arith.mulf %134, %135 : vector<8x128xf32>
    %137 = arith.addf %89, %136 : vector<8x128xf32>
    %c11 = arith.constant 11 : index
    %138 = memref.load %arg1[%c11] : memref<64xf32, #tpu.memory_space<smem>>
    %c31 = arith.constant 31 : index
    %139 = memref.load %arg1[%c31] : memref<64xf32, #tpu.memory_space<smem>>
    %c51 = arith.constant 51 : index
    %140 = memref.load %arg1[%c51] : memref<64xf32, #tpu.memory_space<smem>>
    %141 = vector.broadcast %138 : f32 to vector<8x128xf32>
    %142 = arith.mulf %0, %141 : vector<8x128xf32>
    %143 = vector.broadcast %139 : f32 to vector<8x128xf32>
    %144 = arith.addf %142, %143 : vector<8x128xf32>
    %cst_16 = arith.constant 0.000000e+00 : f32
    %145 = vector.broadcast %cst_16 : f32 to vector<8x128xf32>
    %146 = arith.maximumf %144, %145 : vector<8x128xf32>
    %147 = vector.broadcast %140 : f32 to vector<8x128xf32>
    %148 = arith.mulf %146, %147 : vector<8x128xf32>
    %149 = arith.addf %101, %148 : vector<8x128xf32>
    %c12 = arith.constant 12 : index
    %150 = memref.load %arg1[%c12] : memref<64xf32, #tpu.memory_space<smem>>
    %c32 = arith.constant 32 : index
    %151 = memref.load %arg1[%c32] : memref<64xf32, #tpu.memory_space<smem>>
    %c52 = arith.constant 52 : index
    %152 = memref.load %arg1[%c52] : memref<64xf32, #tpu.memory_space<smem>>
    %153 = vector.broadcast %150 : f32 to vector<8x128xf32>
    %154 = arith.mulf %0, %153 : vector<8x128xf32>
    %155 = vector.broadcast %151 : f32 to vector<8x128xf32>
    %156 = arith.addf %154, %155 : vector<8x128xf32>
    %cst_17 = arith.constant 0.000000e+00 : f32
    %157 = vector.broadcast %cst_17 : f32 to vector<8x128xf32>
    %158 = arith.maximumf %156, %157 : vector<8x128xf32>
    %159 = vector.broadcast %152 : f32 to vector<8x128xf32>
    %160 = arith.mulf %158, %159 : vector<8x128xf32>
    %161 = arith.addf %113, %160 : vector<8x128xf32>
    %c13 = arith.constant 13 : index
    %162 = memref.load %arg1[%c13] : memref<64xf32, #tpu.memory_space<smem>>
    %c33 = arith.constant 33 : index
    %163 = memref.load %arg1[%c33] : memref<64xf32, #tpu.memory_space<smem>>
    %c53 = arith.constant 53 : index
    %164 = memref.load %arg1[%c53] : memref<64xf32, #tpu.memory_space<smem>>
    %165 = vector.broadcast %162 : f32 to vector<8x128xf32>
    %166 = arith.mulf %0, %165 : vector<8x128xf32>
    %167 = vector.broadcast %163 : f32 to vector<8x128xf32>
    %168 = arith.addf %166, %167 : vector<8x128xf32>
    %cst_18 = arith.constant 0.000000e+00 : f32
    %169 = vector.broadcast %cst_18 : f32 to vector<8x128xf32>
    %170 = arith.maximumf %168, %169 : vector<8x128xf32>
    %171 = vector.broadcast %164 : f32 to vector<8x128xf32>
    %172 = arith.mulf %170, %171 : vector<8x128xf32>
    %173 = arith.addf %125, %172 : vector<8x128xf32>
    %c14 = arith.constant 14 : index
    %174 = memref.load %arg1[%c14] : memref<64xf32, #tpu.memory_space<smem>>
    %c34 = arith.constant 34 : index
    %175 = memref.load %arg1[%c34] : memref<64xf32, #tpu.memory_space<smem>>
    %c54 = arith.constant 54 : index
    %176 = memref.load %arg1[%c54] : memref<64xf32, #tpu.memory_space<smem>>
    %177 = vector.broadcast %174 : f32 to vector<8x128xf32>
    %178 = arith.mulf %0, %177 : vector<8x128xf32>
    %179 = vector.broadcast %175 : f32 to vector<8x128xf32>
    %180 = arith.addf %178, %179 : vector<8x128xf32>
    %cst_19 = arith.constant 0.000000e+00 : f32
    %181 = vector.broadcast %cst_19 : f32 to vector<8x128xf32>
    %182 = arith.maximumf %180, %181 : vector<8x128xf32>
    %183 = vector.broadcast %176 : f32 to vector<8x128xf32>
    %184 = arith.mulf %182, %183 : vector<8x128xf32>
    %185 = arith.addf %137, %184 : vector<8x128xf32>
    %c15 = arith.constant 15 : index
    %186 = memref.load %arg1[%c15] : memref<64xf32, #tpu.memory_space<smem>>
    %c35 = arith.constant 35 : index
    %187 = memref.load %arg1[%c35] : memref<64xf32, #tpu.memory_space<smem>>
    %c55 = arith.constant 55 : index
    %188 = memref.load %arg1[%c55] : memref<64xf32, #tpu.memory_space<smem>>
    %189 = vector.broadcast %186 : f32 to vector<8x128xf32>
    %190 = arith.mulf %0, %189 : vector<8x128xf32>
    %191 = vector.broadcast %187 : f32 to vector<8x128xf32>
    %192 = arith.addf %190, %191 : vector<8x128xf32>
    %cst_20 = arith.constant 0.000000e+00 : f32
    %193 = vector.broadcast %cst_20 : f32 to vector<8x128xf32>
    %194 = arith.maximumf %192, %193 : vector<8x128xf32>
    %195 = vector.broadcast %188 : f32 to vector<8x128xf32>
    %196 = arith.mulf %194, %195 : vector<8x128xf32>
    %197 = arith.addf %149, %196 : vector<8x128xf32>
    %c16 = arith.constant 16 : index
    %198 = memref.load %arg1[%c16] : memref<64xf32, #tpu.memory_space<smem>>
    %c36 = arith.constant 36 : index
    %199 = memref.load %arg1[%c36] : memref<64xf32, #tpu.memory_space<smem>>
    %c56 = arith.constant 56 : index
    %200 = memref.load %arg1[%c56] : memref<64xf32, #tpu.memory_space<smem>>
    %201 = vector.broadcast %198 : f32 to vector<8x128xf32>
    %202 = arith.mulf %0, %201 : vector<8x128xf32>
    %203 = vector.broadcast %199 : f32 to vector<8x128xf32>
    %204 = arith.addf %202, %203 : vector<8x128xf32>
    %cst_21 = arith.constant 0.000000e+00 : f32
    %205 = vector.broadcast %cst_21 : f32 to vector<8x128xf32>
    %206 = arith.maximumf %204, %205 : vector<8x128xf32>
    %207 = vector.broadcast %200 : f32 to vector<8x128xf32>
    %208 = arith.mulf %206, %207 : vector<8x128xf32>
    %209 = arith.addf %161, %208 : vector<8x128xf32>
    %c17 = arith.constant 17 : index
    %210 = memref.load %arg1[%c17] : memref<64xf32, #tpu.memory_space<smem>>
    %c37 = arith.constant 37 : index
    %211 = memref.load %arg1[%c37] : memref<64xf32, #tpu.memory_space<smem>>
    %c57 = arith.constant 57 : index
    %212 = memref.load %arg1[%c57] : memref<64xf32, #tpu.memory_space<smem>>
    %213 = vector.broadcast %210 : f32 to vector<8x128xf32>
    %214 = arith.mulf %0, %213 : vector<8x128xf32>
    %215 = vector.broadcast %211 : f32 to vector<8x128xf32>
    %216 = arith.addf %214, %215 : vector<8x128xf32>
    %cst_22 = arith.constant 0.000000e+00 : f32
    %217 = vector.broadcast %cst_22 : f32 to vector<8x128xf32>
    %218 = arith.maximumf %216, %217 : vector<8x128xf32>
    %219 = vector.broadcast %212 : f32 to vector<8x128xf32>
    %220 = arith.mulf %218, %219 : vector<8x128xf32>
    %221 = arith.addf %173, %220 : vector<8x128xf32>
    %c18 = arith.constant 18 : index
    %222 = memref.load %arg1[%c18] : memref<64xf32, #tpu.memory_space<smem>>
    %c38 = arith.constant 38 : index
    %223 = memref.load %arg1[%c38] : memref<64xf32, #tpu.memory_space<smem>>
    %c58 = arith.constant 58 : index
    %224 = memref.load %arg1[%c58] : memref<64xf32, #tpu.memory_space<smem>>
    %225 = vector.broadcast %222 : f32 to vector<8x128xf32>
    %226 = arith.mulf %0, %225 : vector<8x128xf32>
    %227 = vector.broadcast %223 : f32 to vector<8x128xf32>
    %228 = arith.addf %226, %227 : vector<8x128xf32>
    %cst_23 = arith.constant 0.000000e+00 : f32
    %229 = vector.broadcast %cst_23 : f32 to vector<8x128xf32>
    %230 = arith.maximumf %228, %229 : vector<8x128xf32>
    %231 = vector.broadcast %224 : f32 to vector<8x128xf32>
    %232 = arith.mulf %230, %231 : vector<8x128xf32>
    %233 = arith.addf %185, %232 : vector<8x128xf32>
    %c19 = arith.constant 19 : index
    %234 = memref.load %arg1[%c19] : memref<64xf32, #tpu.memory_space<smem>>
    %c39 = arith.constant 39 : index
    %235 = memref.load %arg1[%c39] : memref<64xf32, #tpu.memory_space<smem>>
    %c59 = arith.constant 59 : index
    %236 = memref.load %arg1[%c59] : memref<64xf32, #tpu.memory_space<smem>>
    %237 = vector.broadcast %234 : f32 to vector<8x128xf32>
    %238 = arith.mulf %0, %237 : vector<8x128xf32>
    %239 = vector.broadcast %235 : f32 to vector<8x128xf32>
    %240 = arith.addf %238, %239 : vector<8x128xf32>
    %cst_24 = arith.constant 0.000000e+00 : f32
    %241 = vector.broadcast %cst_24 : f32 to vector<8x128xf32>
    %242 = arith.maximumf %240, %241 : vector<8x128xf32>
    %243 = vector.broadcast %236 : f32 to vector<8x128xf32>
    %244 = arith.mulf %242, %243 : vector<8x128xf32>
    %245 = arith.addf %197, %244 : vector<8x128xf32>
    %246 = arith.addf %209, %221 : vector<8x128xf32>
    %247 = arith.addf %233, %245 : vector<8x128xf32>
    %248 = arith.addf %246, %247 : vector<8x128xf32>
    %249 = vector.broadcast %1 : f32 to vector<8x128xf32>
    %250 = arith.addf %248, %249 : vector<8x128xf32>
    %c0_25 = arith.constant 0 : index
    %c0_26 = arith.constant 0 : index
    %251 = vector.load %arg3[%c0_25, %c0_26] : memref<8x128xf32, #tpu.memory_space<vmem>>, vector<8x128xf32>
    tpu.vector_store %arg3[%c0_25, %c0_26], %250 {strides = array<i32>} : memref<8x128xf32, #tpu.memory_space<vmem>>, vector<8x128xf32>,
    return
  }
  func.func @transform_0(%arg0: i32) -> i32 {
    %c0_i32 = arith.constant 0 : i32
    %c0_i32_0 = arith.constant 0 : i32
    return %c0_i32 : i32
  }
  func.func @transform_1(%arg0: i32) -> (i32, i32) {
    %c0_i32 = arith.constant 0 : i32
    %c0_i32_0 = arith.constant 0 : i32
    return %arg0, %c0_i32 : i32, i32
  }
  func.func @transform_2(%arg0: i32) -> (i32, i32) {
    %c0_i32 = arith.constant 0 : i32
    %c0_i32_0 = arith.constant 0 : i32
    return %arg0, %c0_i32 : i32, i32
  }
}

</mosaic_0001>

<llo_original>
// kernel: net_forward.1
$region0: #{net_forward.1}
  #allocation0 [shape = 'u32[]', space=smem, size = 0x4, offset = 0x4, fixed_abs, tag = 'smem constant byte address 0x4 - core index']
  #allocation1 [shape = 'u32[144,128]{1,0:T(1,128)}', space=vmem, size = 0x12000, scoped, tag = 'internal scratch']
  %s0 = inlined_call_operand.vmem [shape: f32[64], index: 0, kind: input, shape index: {}]
  %s1 = inlined_call_operand.vmem [shape: f32[8,128], index: 1, kind: input, shape index: {}]
  %s2 = inlined_call_operand.hbm [shape: f32[8,128], index: 2, kind: output, shape index: {}]
  %s3 = sld [smem:[#allocation0]]
  $region22: #{net_forward.1} parent=0
    _
  %s5 = ssub.s32 1, %s3
  %s6 = scalar_select 0, %s5, %s3
  $region1: #{net_forward.1} parent=0
    #allocation2 [shape = 'u8[512]{0}', space=smem, size = 0x200, scoped, tag = 'input window, operand 0, single buffered']
    #allocation3 [shape = 's32[1]{0}', space=sflag, size = 0x4, scoped, tag = 'scoped memory for net_forward.1']
    #allocation4 [shape = 's32[1]{0}', space=sflag, size = 0x4, scoped, tag = 'scoped memory for net_forward.1']
    #allocation5 [shape = 'u8[4096]{0}', space=vmem, size = 0x1000, scoped, tag = 'output window, operand 0, single buffered']
    %7 = vsyncpa [#allocation4], 0
    %8 = vsyncpa [#allocation3], 0
    // Predicated region
    $region2: #{net_forward.1} parent=1 // pred_check
      _
    $region3: #{net_forward.1} parent=1 // pred_check_branch
      %10 = sbr.rel (0) target = $region5
    $region4: #{net_forward.1} parent=1 // pred_region
      %s12 = ssub.s32 16, 16
      %13 = vsyncadd [#allocation4], %s12
      %s15 = sshll.u32 %s0, 4
      %s16 = int_to_ptr.vmem [resolvable:$true] %s15
      %18 = dma.vmem_to_smem %s16, 16, [#allocation2], [#allocation4]
    $region5: #{net_forward.1} parent=1 // pred_fallthru
      _
    // Predicated region
    $region6: #{net_forward.1} parent=1 // pred_check
      _
    $region7: #{net_forward.1} parent=1 // pred_check_branch
      %20 = sbr.rel (0) target = $region9
    $region8: #{net_forward.1} parent=1 // pred_region
      _
    $region9: #{net_forward.1} parent=1 // pred_fallthru
      _
    // Predicated region
    $region10: #{net_forward.1} parent=1 // pred_check
      _
    $region11: #{net_forward.1} parent=1 // pred_check_branch
      %22 = sbr.rel (0) target = $region13
    $region12: #{net_forward.1} parent=1 // pred_region
      %23 = dma.done [#allocation4], 16
    $region13: #{net_forward.1} parent=1 // pred_fallthru
      _
    %24 = sfence
    %v25 = vld [vmem:[%s1] sm:$0xff]
    %s26 = sld [smem:[#allocation2 + $0x3c]]
    %s27 = sld [smem:[#allocation2]]
    %s28 = sld [smem:[#allocation2 + $0x14]]
    %s29 = sld [smem:[#allocation2 + $0x28]]
    %v30 = vstv %s27
    %v31 = vmul.f32 %v25, %v30
    %v32 = vstv %s28
    %v33 = vadd.f32 %v31, %v32
    %v34 = vmax.f32 %v33, 0.0
    %v35 = vstv %s29
    %v36 = vmul.f32 %v34, %v35
    %v37 = vadd.f32 %v36, 0.0
    %s38 = sld [smem:[#allocation2 + $0x1]]
    %s39 = sld [smem:[#allocation2 + $0x15]]
    %s40 = sld [smem:[#allocation2 + $0x29]]
    %v41 = vstv %s38
    %v42 = vmul.f32 %v25, %v41
    %v43 = vstv %s39
    %v44 = vadd.f32 %v42, %v43
    %v45 = vmax.f32 %v44, 0.0
    %v46 = vstv %s40
    %v47 = vmul.f32 %v45, %v46
    %v48 = vadd.f32 %v47, 0.0
    %s49 = sld [smem:[#allocation2 + $0x2]]
    %s50 = sld [smem:[#allocation2 + $0x16]]
    %s51 = sld [smem:[#allocation2 + $0x2a]]
    %v52 = vstv %s49
    %v53 = vmul.f32 %v25, %v52
    %v54 = vstv %s50
    %v55 = vadd.f32 %v53, %v54
    %v56 = vmax.f32 %v55, 0.0
    %v57 = vstv %s51
    %v58 = vmul.f32 %v56, %v57
    %v59 = vadd.f32 %v58, 0.0
    %s60 = sld [smem:[#allocation2 + $0x3]]
    %s61 = sld [smem:[#allocation2 + $0x17]]
    %s62 = sld [smem:[#allocation2 + $0x2b]]
    %v63 = vstv %s60
    %v64 = vmul.f32 %v25, %v63
    %v65 = vstv %s61
    %v66 = vadd.f32 %v64, %v65
    %v67 = vmax.f32 %v66, 0.0
    %v68 = vstv %s62
    %v69 = vmul.f32 %v67, %v68
    %v70 = vadd.f32 %v69, 0.0
    %s71 = sld [smem:[#allocation2 + $0x4]]
    %s72 = sld [smem:[#allocation2 + $0x18]]
    %s73 = sld [smem:[#allocation2 + $0x2c]]
    %v74 = vstv %s71
    %v75 = vmul.f32 %v25, %v74
    %v76 = vstv %s72
    %v77 = vadd.f32 %v75, %v76
    %v78 = vmax.f32 %v77, 0.0
    %v79 = vstv %s73
    %v80 = vmul.f32 %v78, %v79
    %v81 = vadd.f32 %v37, %v80
    %s82 = sld [smem:[#allocation2 + $0x5]]
    %s83 = sld [smem:[#allocation2 + $0x19]]
    %s84 = sld [smem:[#allocation2 + $0x2d]]
    %v85 = vstv %s82
    %v86 = vmul.f32 %v25, %v85
    %v87 = vstv %s83
    %v88 = vadd.f32 %v86, %v87
    %v89 = vmax.f32 %v88, 0.0
    %v90 = vstv %s84
    %v91 = vmul.f32 %v89, %v90
    %v92 = vadd.f32 %v48, %v91
    %s93 = sld [smem:[#allocation2 + $0x6]]
    %s94 = sld [smem:[#allocation2 + $0x1a]]
    %s95 = sld [smem:[#allocation2 + $0x2e]]
    %v96 = vstv %s93
    %v97 = vmul.f32 %v25, %v96
    %v98 = vstv %s94
    %v99 = vadd.f32 %v97, %v98
    %v100 = vmax.f32 %v99, 0.0
    %v101 = vstv %s95
    %v102 = vmul.f32 %v100, %v101
    %v103 = vadd.f32 %v59, %v102
    %s104 = sld [smem:[#allocation2 + $0x7]]
    %s105 = sld [smem:[#allocation2 + $0x1b]]
    %s106 = sld [smem:[#allocation2 + $0x2f]]
    %v107 = vstv %s104
    %v108 = vmul.f32 %v25, %v107
    %v109 = vstv %s105
    %v110 = vadd.f32 %v108, %v109
    %v111 = vmax.f32 %v110, 0.0
    %v112 = vstv %s106
    %v113 = vmul.f32 %v111, %v112
    %v114 = vadd.f32 %v70, %v113
    %s115 = sld [smem:[#allocation2 + $0x8]]
    %s116 = sld [smem:[#allocation2 + $0x1c]]
    %s117 = sld [smem:[#allocation2 + $0x30]]
    %v118 = vstv %s115
    %v119 = vmul.f32 %v25, %v118
    %v120 = vstv %s116
    %v121 = vadd.f32 %v119, %v120
    %v122 = vmax.f32 %v121, 0.0
    %v123 = vstv %s117
    %v124 = vmul.f32 %v122, %v123
    %v125 = vadd.f32 %v81, %v124
    %s126 = sld [smem:[#allocation2 + $0x9]]
    %s127 = sld [smem:[#allocation2 + $0x1d]]
    %s128 = sld [smem:[#allocation2 + $0x31]]
    %v129 = vstv %s126
    %v130 = vmul.f32 %v25, %v129
    %v131 = vstv %s127
    %v132 = vadd.f32 %v130, %v131
    %v133 = vmax.f32 %v132, 0.0
    %v134 = vstv %s128
    %v135 = vmul.f32 %v133, %v134
    %v136 = vadd.f32 %v92, %v135
    %s137 = sld [smem:[#allocation2 + $0xa]]
    %s138 = sld [smem:[#allocation2 + $0x1e]]
    %s139 = sld [smem:[#allocation2 + $0x32]]
    %v140 = vstv %s137
    %v141 = vmul.f32 %v25, %v140
    %v142 = vstv %s138
    %v143 = vadd.f32 %v141, %v142
    %v144 = vmax.f32 %v143, 0.0
    %v145 = vstv %s139
    %v146 = vmul.f32 %v144, %v145
    %v147 = vadd.f32 %v103, %v146
    %s148 = sld [smem:[#allocation2 + $0xb]]
    %s149 = sld [smem:[#allocation2 + $0x1f]]
    %s150 = sld [smem:[#allocation2 + $0x33]]
    %v151 = vstv %s148
    %v152 = vmul.f32 %v25, %v151
    %v153 = vstv %s149
    %v154 = vadd.f32 %v152, %v153
    %v155 = vmax.f32 %v154, 0.0
    %v156 = vstv %s150
    %v157 = vmul.f32 %v155, %v156
    %v158 = vadd.f32 %v114, %v157
    %s159 = sld [smem:[#allocation2 + $0xc]]
    %s160 = sld [smem:[#allocation2 + $0x20]]
    %s161 = sld [smem:[#allocation2 + $0x34]]
    %v162 = vstv %s159
    %v163 = vmul.f32 %v25, %v162
    %v164 = vstv %s160
    %v165 = vadd.f32 %v163, %v164
    %v166 = vmax.f32 %v165, 0.0
    %v167 = vstv %s161
    %v168 = vmul.f32 %v166, %v167
    %v169 = vadd.f32 %v125, %v168
    %s170 = sld [smem:[#allocation2 + $0xd]]
    %s171 = sld [smem:[#allocation2 + $0x21]]
    %s172 = sld [smem:[#allocation2 + $0x35]]
    %v173 = vstv %s170
    %v174 = vmul.f32 %v25, %v173
    %v175 = vstv %s171
    %v176 = vadd.f32 %v174, %v175
    %v177 = vmax.f32 %v176, 0.0
    %v178 = vstv %s172
    %v179 = vmul.f32 %v177, %v178
    %v180 = vadd.f32 %v136, %v179
    %s181 = sld [smem:[#allocation2 + $0xe]]
    %s182 = sld [smem:[#allocation2 + $0x22]]
    %s183 = sld [smem:[#allocation2 + $0x36]]
    %v184 = vstv %s181
    %v185 = vmul.f32 %v25, %v184
    %v186 = vstv %s182
    %v187 = vadd.f32 %v185, %v186
    %v188 = vmax.f32 %v187, 0.0
    %v189 = vstv %s183
    %v190 = vmul.f32 %v188, %v189
    %v191 = vadd.f32 %v147, %v190
    %s192 = sld [smem:[#allocation2 + $0xf]]
    %s193 = sld [smem:[#allocation2 + $0x23]]
    %s194 = sld [smem:[#allocation2 + $0x37]]
    %v195 = vstv %s192
    %v196 = vmul.f32 %v25, %v195
    %v197 = vstv %s193
    %v198 = vadd.f32 %v196, %v197
    %v199 = vmax.f32 %v198, 0.0
    %v200 = vstv %s194
    %v201 = vmul.f32 %v199, %v200
    %v202 = vadd.f32 %v158, %v201
    %s203 = sld [smem:[#allocation2 + $0x10]]
    %s204 = sld [smem:[#allocation2 + $0x24]]
    %s205 = sld [smem:[#allocation2 + $0x38]]
    %v206 = vstv %s203
    %v207 = vmul.f32 %v25, %v206
    %v208 = vstv %s204
    %v209 = vadd.f32 %v207, %v208
    %v210 = vmax.f32 %v209, 0.0
    %v211 = vstv %s205
    %v212 = vmul.f32 %v210, %v211
    %v213 = vadd.f32 %v169, %v212
    %s214 = sld [smem:[#allocation2 + $0x11]]
    %s215 = sld [smem:[#allocation2 + $0x25]]
    %s216 = sld [smem:[#allocation2 + $0x39]]
    %v217 = vstv %s214
    %v218 = vmul.f32 %v25, %v217
    %v219 = vstv %s215
    %v220 = vadd.f32 %v218, %v219
    %v221 = vmax.f32 %v220, 0.0
    %v222 = vstv %s216
    %v223 = vmul.f32 %v221, %v222
    %v224 = vadd.f32 %v180, %v223
    %s225 = sld [smem:[#allocation2 + $0x12]]
    %s226 = sld [smem:[#allocation2 + $0x26]]
    %s227 = sld [smem:[#allocation2 + $0x3a]]
    %v228 = vstv %s225
    %v229 = vmul.f32 %v25, %v228
    %v230 = vstv %s226
    %v231 = vadd.f32 %v229, %v230
    %v232 = vmax.f32 %v231, 0.0
    %v233 = vstv %s227
    %v234 = vmul.f32 %v232, %v233
    %v235 = vadd.f32 %v191, %v234
    %s236 = sld [smem:[#allocation2 + $0x13]]
    %s237 = sld [smem:[#allocation2 + $0x27]]
    %s238 = sld [smem:[#allocation2 + $0x3b]]
    %v239 = vstv %s236
    %v240 = vmul.f32 %v25, %v239
    %v241 = vstv %s237
    %v242 = vadd.f32 %v240, %v241
    %v243 = vmax.f32 %v242, 0.0
    %v244 = vstv %s238
    %v245 = vmul.f32 %v243, %v244
    %v246 = vadd.f32 %v202, %v245
    %v247 = vadd.f32 %v213, %v224
    %v248 = vadd.f32 %v235, %v246
    %v249 = vadd.f32 %v247, %v248
    %v250 = vstv %s26
    %v251 = vadd.f32 %v249, %v250
    %252 = vst [vmem:[#allocation5] sm:$0xff] %v251
    // Predicated region
    $region14: #{net_forward.1} parent=1 // pred_check
      _
    $region15: #{net_forward.1} parent=1 // pred_check_branch
      %254 = sbr.rel (0) target = $region17
    $region16: #{net_forward.1} parent=1 // pred_region
      %s256 = ssub.s32 128, 128
      %257 = vsyncadd [#allocation3], %s256
      %s259 = sshll.u32 [#allocation5], 4
      %s260 = int_to_ptr.vmem [resolvable:$true] %s259
      %262 = dma.vmem_to_hbm [thread:$0]  %s260, 128, %s2, [#allocation3]
    $region17: #{net_forward.1} parent=1 // pred_fallthru
      _
    // Predicated region
    $region18: #{net_forward.1} parent=1 // pred_check
      _
    $region19: #{net_forward.1} parent=1 // pred_check_branch
      %264 = sbr.rel (0) target = $region21
    $region20: #{net_forward.1} parent=1 // pred_region
      %265 = dma.done [#allocation3], 128
    $region21: #{net_forward.1} parent=1 // pred_fallthru
      _
    %266 = vsyncpa [#allocation3], 1
    %267 = vsyncpa [#allocation4], 1

</llo_original>
